<compile_context>
chip_gen: v7x
topology: tpu7x:2x2x1
jax: 0.10.0
libtpu: 0.0.40
codegen_flags: <defaults>
</compile_context>

<pallas_src>
import jax
import jax.numpy as jnp
from jax.experimental import pallas as pl
from jax.experimental.pallas import tpu as pltpu


def _round_up(x: int, m: int) -> int:
    return (x + m - 1) // m * m


def _make_kernel(n_det: int, tile_n: int, n_inner: int, need_mask: bool):
    """Fused CE + SmoothL1 kernel; static sizes are closed over."""
    inv_n = 1.0 / float(n_det)
    inv_box = 1.0 / float(4 * n_det)

    def kernel(scores_ref, labels_ref, pbox_ref, tbox_ref, out_ref,
               acc_cls, acc_box):
        j = pl.program_id(1)
        last = pl.num_programs(1) - 1

        @pl.when(j == 0)
        def _init():
            acc_cls[...] = jnp.zeros_like(acc_cls)
            acc_box[...] = jnp.zeros_like(acc_box)

        # ---- Cross-entropy per-row terms for this row tile ----
        scores = scores_ref[...].astype(jnp.float32)            # (tile_n, C)
        labels = labels_ref[...]                                 # (tile_n, 1) int32
        tn, c = scores.shape

        row_max = jnp.max(scores, axis=-1, keepdims=True)        # (tile_n, 1)
        shifted = scores - row_max
        lse = jnp.log(jnp.sum(jnp.exp(shifted), axis=-1, keepdims=True))
        class_ids = jax.lax.broadcasted_iota(jnp.int32, (tn, c), 1)
        # Select-and-sum instead of a one-hot multiply; lse/picked both use the
        # shifted logits so row_max cancels: (lse+m) - (picked+m) = lse - picked.
        picked = jnp.sum(jnp.where(class_ids == labels, shifted, 0.0),
                         axis=-1, keepdims=True)                 # (tile_n, 1)
        per_row = lse - picked                                   # unscaled

        # ---- Smooth-L1 (beta=1) per-element terms for this row tile ----
        d = pbox_ref[...].astype(jnp.float32) - tbox_ref[...].astype(jnp.float32)
        ad = jnp.abs(d)
        sm = jnp.where(ad < 1.0, 0.5 * d * d, ad - 0.5)          # (tile_n, 4)

        if need_mask:
            i = pl.program_id(0)
            row_ids = (i * n_inner + j) * tile_n + jax.lax.broadcasted_iota(
                jnp.int32, (tn, 1), 0)
            valid = row_ids < n_det
            per_row = jnp.where(valid, per_row, 0.0)             # select: NaN-safe
            sm = jnp.where(valid, sm, 0.0)

        # Vector accumulation only (no per-step cross-lane reduce).
        acc_cls[...] = acc_cls[...] + per_row
        acc_box[...] = acc_box[...] + sm

        # ---- Finalize: one reduction + scaling per core ----
        @pl.when(j == last)
        def _finalize():
            out_ref[0, 0] = jnp.sum(acc_cls[...]) * inv_n
            out_ref[0, 1] = jnp.sum(acc_box[...]) * inv_box

    return kernel


def detection_loss(predictions, targets, *, tile_n: int = 1024):
    """Pallas implementation of DetectionLoss.forward.

    predictions: {'class_scores': (N, C) float, 'boxes': (N, 4) float}
    targets:     {'labels': (N,) int,           'boxes': (N, 4) float}
    Returns (total_loss: shape-(1,) array, dict of device-scalar components).
    """
    scores = predictions['class_scores']
    pred_boxes = predictions['boxes']
    labels = targets['labels'].astype(jnp.int32)
    tgt_boxes = targets['boxes']

    n, c = scores.shape
    tile_n = min(tile_n, _round_up(n, 8))
    n_tiles = pl.cdiv(n, tile_n)
    n_outer = 2 if n_tiles >= 2 else 1          # v7x: split rows over both TCs
    n_inner = pl.cdiv(n_tiles, n_outer)
    # Tail rows of partial blocks and any phantom tile are masked in-kernel;
    # no wrapper-side jnp.pad (saves a full HBM pass over scores).
    need_mask = (n_outer * n_inner * tile_n) != n

    if n_outer * n_inner == n_tiles:
        row_block = lambda i, j: (i * n_inner + j, 0)
    else:
        # Clamp phantom tile indices so the DMA stays in bounds; the row mask
        # zeroes their contribution.
        row_block = lambda i, j: (jnp.minimum(i * n_inner + j, n_tiles - 1), 0)

    labels2d = labels.reshape(n, 1)
    kernel = _make_kernel(n, tile_n, n_inner, need_mask)

    out = pl.pallas_call(
        kernel,
        out_shape=jax.ShapeDtypeStruct((n_outer, 2), jnp.float32),
        grid=(n_outer, n_inner),
        in_specs=[
            pl.BlockSpec((tile_n, c), row_block),   # class scores tile
            pl.BlockSpec((tile_n, 1), row_block),   # labels tile
            pl.BlockSpec((tile_n, 4), row_block),   # predicted boxes tile
            pl.BlockSpec((tile_n, 4), row_block),   # target boxes tile
        ],
        out_specs=pl.BlockSpec((1, 2), lambda i, j: (i, 0),
                               memory_space=pltpu.MemorySpace.SMEM),
        scratch_shapes=[pltpu.VMEM((tile_n, 1), jnp.float32),   # CE accumulator
                        pltpu.VMEM((tile_n, 4), jnp.float32)],  # box accumulator
        compiler_params=pltpu.CompilerParams(
            dimension_semantics=("parallel", "arbitrary")),
    )(scores, labels2d, pred_boxes, tgt_boxes)

    cls_loss = jnp.sum(out[:, 0])                 # sum of per-core partials
    box_loss = jnp.sum(out[:, 1])
    obj_loss = jnp.zeros((1,), dtype=jnp.float32)  # matches torch.zeros(1)
    total_loss = cls_loss + box_loss + obj_loss    # shape (1,)

    # TODO(synk): torch returns .item() host floats; kept as device scalars to stay jit-safe.
    components = {'cls_loss': cls_loss, 'box_loss': box_loss, 'obj_loss': obj_loss[0]}
    return total_loss, components


def _reference(predictions, targets):
    """Pure-JAX reference of the same math for a sanity check."""
    scores = predictions['class_scores'].astype(jnp.float32)
    labels = targets['labels'].astype(jnp.int32)
    logz = jax.scipy.special.logsumexp(scores, axis=-1)
    picked = jnp.take_along_axis(scores, labels[:, None], axis=-1)[:, 0]
    cls_loss = jnp.mean(logz - picked)
    d = predictions['boxes'].astype(jnp.float32) - targets['boxes'].astype(jnp.float32)
    ad = jnp.abs(d)
    box_loss = jnp.mean(jnp.where(ad < 1.0, 0.5 * d * d, ad - 0.5))
    return cls_loss + box_loss


if __name__ == "__main__":
    key = jax.random.PRNGKey(0)

    def make_inputs(k, n, c):
        k1, k2, k3, k4 = jax.random.split(k, 4)
        predictions = {
            'class_scores': jax.random.normal(k1, (n, c), dtype=jnp.float32),
            'boxes': jax.random.normal(k2, (n, 4), dtype=jnp.float32),
        }
        targets = {
            'labels': jax.random.randint(k3, (n,), 0, c, dtype=jnp.int32),
            'boxes': jax.random.normal(k4, (n, 4), dtype=jnp.float32),
        }
        return predictions, targets

    # n=8: single tile, no mask.  n=300: single partial tile + row mask.
    # n=2000: two tiles split across the parallel axis (partial tail block).
    # n=3000: odd tile count -> clamped phantom-tile path.
    for n, c in [(8, 16), (300, 16), (2000, 16), (3000, 16)]:
        preds, tgts = make_inputs(jax.random.fold_in(key, n), n, c)
        total_loss, comps = detection_loss(preds, tgts)
        total_loss = jax.block_until_ready(total_loss)
        ref = jax.block_until_ready(_reference(preds, tgts))
        assert total_loss.shape == (1,)
        err = abs(float(total_loss[0]) - float(ref))
        assert err < 1e-3 * max(1.0, abs(float(ref))), (n, float(total_loss[0]), float(ref))

    print("KERNEL_OK")
</pallas_src>

<mosaic_0001>
module attributes {stable_mosaic.version = 11 : i64} {
  func.func @kernel(%arg0: i32, %arg1: i32, %arg2: memref<8x16xf32, #tpu.memory_space<vmem>>, %arg3: memref<8x1xi32, #tpu.memory_space<vmem>>, %arg4: memref<8x4xf32, #tpu.memory_space<vmem>>, %arg5: memref<8x4xf32, #tpu.memory_space<vmem>>, %arg6: memref<1x2xf32, #tpu.memory_space<smem>>, %arg7: memref<8x1xf32, #tpu.memory_space<vmem>>, %arg8: memref<8x4xf32, #tpu.memory_space<vmem>>) attributes {dimension_semantics = [#tpu.dimension_semantics<parallel>, #tpu.dimension_semantics<arbitrary>], iteration_bounds = array<i64: 1, 1>, scalar_prefetch = 0 : i64, scratch_operands = 2 : i64, tpu.core_type = #tpu.core_type<tc>, window_params = [{transform_indices = @transform_0, window_bounds = array<i64: 8, 16>}, {transform_indices = @transform_1, window_bounds = array<i64: 8, 1>}, {transform_indices = @transform_2, window_bounds = array<i64: 8, 4>}, {transform_indices = @transform_3, window_bounds = array<i64: 8, 4>}, {transform_indices = @transform_4, window_bounds = array<i64: 1, 2>}]} {
    %c0_i32 = arith.constant 0 : i32
    %0 = arith.cmpi eq, %arg1, %c0_i32 : i32
    %1 = arith.extui %0 : i1 to i32
    %c0_i32_0 = arith.constant 0 : i32
    %2 = arith.cmpi ne, %1, %c0_i32_0 : i32
    scf.if %2 {
      %cst_24 = arith.constant 0.000000e+00 : f32
      %42 = vector.broadcast %cst_24 : f32 to vector<8x1xf32>
      %c0_25 = arith.constant 0 : index
      %c0_26 = arith.constant 0 : index
      %43 = vector.load %arg7[%c0_25, %c0_26] : memref<8x1xf32, #tpu.memory_space<vmem>>, vector<8x1xf32>
      tpu.vector_store %arg7[%c0_25, %c0_26], %42 {strides = array<i32>} : memref<8x1xf32, #tpu.memory_space<vmem>>, vector<8x1xf32>,
      %cst_27 = arith.constant 0.000000e+00 : f32
      %44 = vector.broadcast %cst_27 : f32 to vector<8x4xf32>
      %c0_28 = arith.constant 0 : index
      %c0_29 = arith.constant 0 : index
      %45 = vector.load %arg8[%c0_28, %c0_29] : memref<8x4xf32, #tpu.memory_space<vmem>>, vector<8x4xf32>
      tpu.vector_store %arg8[%c0_28, %c0_29], %44 {strides = array<i32>} : memref<8x4xf32, #tpu.memory_space<vmem>>, vector<8x4xf32>,
    } else {
    }
    %c0 = arith.constant 0 : index
    %c0_1 = arith.constant 0 : index
    %3 = vector.load %arg2[%c0, %c0_1] : memref<8x16xf32, #tpu.memory_space<vmem>>, vector<8x16xf32>
    %c0_2 = arith.constant 0 : index
    %c0_3 = arith.constant 0 : index
    %4 = vector.load %arg3[%c0_2, %c0_3] : memref<8x1xi32, #tpu.memory_space<vmem>>, vector<8x1xi32>
    %cst = arith.constant dense<0xFF800000> : vector<8xf32>
    %5 = vector.multi_reduction <maximumf>, %3, %cst [1] : vector<8x16xf32> to vector<8xf32>
    %6 = vector.shape_cast %5 : vector<8xf32> to vector<8x1xf32>
    %7 = vector.broadcast %6 : vector<8x1xf32> to vector<8x16xf32>
    %8 = arith.subf %3, %7 : vector<8x16xf32>
    %9 = math.exp %8 : vector<8x16xf32>
    %cst_4 = arith.constant dense<0.000000e+00> : vector<8xf32>
    %10 = vector.multi_reduction <add>, %9, %cst_4 [1] : vector<8x16xf32> to vector<8xf32>
    %11 = vector.shape_cast %10 : vector<8xf32> to vector<8x1xf32>
    %12 = math.log %11 : vector<8x1xf32>
    %13 = tpu.iota {dimensions = array<i32: 1>} : vector<8x16xi32>
    %14 = vector.broadcast %4 : vector<8x1xi32> to vector<8x16xi32>
    %15 = arith.cmpi eq, %13, %14 : vector<8x16xi32>
    %cst_5 = arith.constant 0.000000e+00 : f32
    %16 = vector.broadcast %cst_5 : f32 to vector<8x16xf32>
    %17 = arith.select %15, %8, %16 : vector<8x16xi1>, vector<8x16xf32>
    %cst_6 = arith.constant dense<0.000000e+00> : vector<8xf32>
    %18 = vector.multi_reduction <add>, %17, %cst_6 [1] : vector<8x16xf32> to vector<8xf32>
    %19 = vector.shape_cast %18 : vector<8xf32> to vector<8x1xf32>
    %20 = arith.subf %12, %19 : vector<8x1xf32>
    %c0_7 = arith.constant 0 : index
    %c0_8 = arith.constant 0 : index
    %21 = vector.load %arg4[%c0_7, %c0_8] : memref<8x4xf32, #tpu.memory_space<vmem>>, vector<8x4xf32>
    %c0_9 = arith.constant 0 : index
    %c0_10 = arith.constant 0 : index
    %22 = vector.load %arg5[%c0_9, %c0_10] : memref<8x4xf32, #tpu.memory_space<vmem>>, vector<8x4xf32>
    %23 = arith.subf %21, %22 : vector<8x4xf32>
    %24 = math.absf %23 : vector<8x4xf32>
    %cst_11 = arith.constant 1.000000e+00 : f32
    %25 = vector.broadcast %cst_11 : f32 to vector<8x4xf32>
    %26 = arith.cmpf olt, %24, %25 : vector<8x4xf32>
    %cst_12 = arith.constant 5.000000e-01 : f32
    %27 = vector.broadcast %cst_12 : f32 to vector<8x4xf32>
    %28 = arith.mulf %27, %23 : vector<8x4xf32>
    %29 = arith.mulf %28, %23 : vector<8x4xf32>
    %cst_13 = arith.constant 5.000000e-01 : f32
    %30 = vector.broadcast %cst_13 : f32 to vector<8x4xf32>
    %31 = arith.subf %24, %30 : vector<8x4xf32>
    %32 = arith.select %26, %29, %31 : vector<8x4xi1>, vector<8x4xf32>
    %c0_14 = arith.constant 0 : index
    %c0_15 = arith.constant 0 : index
    %33 = vector.load %arg7[%c0_14, %c0_15] : memref<8x1xf32, #tpu.memory_space<vmem>>, vector<8x1xf32>
    %34 = arith.addf %33, %20 : vector<8x1xf32>
    %c0_16 = arith.constant 0 : index
    %c0_17 = arith.constant 0 : index
    %35 = vector.load %arg7[%c0_16, %c0_17] : memref<8x1xf32, #tpu.memory_space<vmem>>, vector<8x1xf32>
    tpu.vector_store %arg7[%c0_16, %c0_17], %34 {strides = array<i32>} : memref<8x1xf32, #tpu.memory_space<vmem>>, vector<8x1xf32>,
    %c0_18 = arith.constant 0 : index
    %c0_19 = arith.constant 0 : index
    %36 = vector.load %arg8[%c0_18, %c0_19] : memref<8x4xf32, #tpu.memory_space<vmem>>, vector<8x4xf32>
    %37 = arith.addf %36, %32 : vector<8x4xf32>
    %c0_20 = arith.constant 0 : index
    %c0_21 = arith.constant 0 : index
    %38 = vector.load %arg8[%c0_20, %c0_21] : memref<8x4xf32, #tpu.memory_space<vmem>>, vector<8x4xf32>
    tpu.vector_store %arg8[%c0_20, %c0_21], %37 {strides = array<i32>} : memref<8x4xf32, #tpu.memory_space<vmem>>, vector<8x4xf32>,
    %c0_i32_22 = arith.constant 0 : i32
    %39 = arith.cmpi eq, %arg1, %c0_i32_22 : i32
    %40 = arith.extui %39 : i1 to i32
    %c0_i32_23 = arith.constant 0 : i32
    %41 = arith.cmpi ne, %40, %c0_i32_23 : i32
    scf.if %41 {
      %c0_24 = arith.constant 0 : index
      %c0_25 = arith.constant 0 : index
      %42 = vector.load %arg7[%c0_24, %c0_25] : memref<8x1xf32, #tpu.memory_space<vmem>>, vector<8x1xf32>
      %43 = vector.shape_cast %42 : vector<8x1xf32> to vector<1x8x1xf32>
      %cst_26 = arith.constant dense<0.000000e+00> : vector<1xf32>
      %44 = vector.multi_reduction <add>, %43, %cst_26 [1, 2] : vector<1x8x1xf32> to vector<1xf32>
      %45 = vector.shape_cast %44 : vector<1xf32> to vector<1x1x1xf32>
      %46 = vector.extract %45[0, 0, 0] : f32 from vector<1x1x1xf32>
      %cst_27 = arith.constant 1.250000e-01 : f32
      %47 = arith.mulf %46, %cst_27 : f32
      %c0_28 = arith.constant 0 : index
      %c0_29 = arith.constant 0 : index
      %48 = memref.load %arg6[%c0_28, %c0_29] : memref<1x2xf32, #tpu.memory_space<smem>>
      memref.store %47, %arg6[%c0_28, %c0_29] : memref<1x2xf32, #tpu.memory_space<smem>>
      %c0_30 = arith.constant 0 : index
      %c0_31 = arith.constant 0 : index
      %49 = vector.load %arg8[%c0_30, %c0_31] : memref<8x4xf32, #tpu.memory_space<vmem>>, vector<8x4xf32>
      %50 = vector.shape_cast %49 : vector<8x4xf32> to vector<1x8x4xf32>
      %cst_32 = arith.constant dense<0.000000e+00> : vector<1xf32>
      %51 = vector.multi_reduction <add>, %50, %cst_32 [1, 2] : vector<1x8x4xf32> to vector<1xf32>
      %52 = vector.shape_cast %51 : vector<1xf32> to vector<1x1x1xf32>
      %53 = vector.extract %52[0, 0, 0] : f32 from vector<1x1x1xf32>
      %cst_33 = arith.constant 3.125000e-02 : f32
      %54 = arith.mulf %53, %cst_33 : f32
      %c0_34 = arith.constant 0 : index
      %c1 = arith.constant 1 : index
      %55 = memref.load %arg6[%c0_34, %c1] : memref<1x2xf32, #tpu.memory_space<smem>>
      memref.store %54, %arg6[%c0_34, %c1] : memref<1x2xf32, #tpu.memory_space<smem>>
    } else {
    }
    return
  }
  func.func @transform_0(%arg0: i32, %arg1: i32) -> (i32, i32) {
    %c1_i32 = arith.constant 1 : i32
    %0 = arith.muli %arg0, %c1_i32 : i32
    %1 = arith.addi %0, %arg1 : i32
    %c0_i32 = arith.constant 0 : i32
    %c0_i32_0 = arith.constant 0 : i32
    return %1, %c0_i32 : i32, i32
  }
  func.func @transform_1(%arg0: i32, %arg1: i32) -> (i32, i32) {
    %c1_i32 = arith.constant 1 : i32
    %0 = arith.muli %arg0, %c1_i32 : i32
    %1 = arith.addi %0, %arg1 : i32
    %c0_i32 = arith.constant 0 : i32
    %c0_i32_0 = arith.constant 0 : i32
    return %1, %c0_i32 : i32, i32
  }
  func.func @transform_2(%arg0: i32, %arg1: i32) -> (i32, i32) {
    %c1_i32 = arith.constant 1 : i32
    %0 = arith.muli %arg0, %c1_i32 : i32
    %1 = arith.addi %0, %arg1 : i32
    %c0_i32 = arith.constant 0 : i32
    %c0_i32_0 = arith.constant 0 : i32
    return %1, %c0_i32 : i32, i32
  }
  func.func @transform_3(%arg0: i32, %arg1: i32) -> (i32, i32) {
    %c1_i32 = arith.constant 1 : i32
    %0 = arith.muli %arg0, %c1_i32 : i32
    %1 = arith.addi %0, %arg1 : i32
    %c0_i32 = arith.constant 0 : i32
    %c0_i32_0 = arith.constant 0 : i32
    return %1, %c0_i32 : i32, i32
  }
  func.func @transform_4(%arg0: i32, %arg1: i32) -> (i32, i32) {
    %c0_i32 = arith.constant 0 : i32
    %c0_i32_0 = arith.constant 0 : i32
    return %arg0, %c0_i32 : i32, i32
  }
}

</mosaic_0001>

<llo_original>
// kernel: tpu_custom_call.1
$region0: #{tpu_custom_call.1}
  #allocation0 [shape = 'u32[]', space=smem, size = 0x4, offset = 0x4, fixed_abs, tag = 'smem constant byte address 0x4 - core index']
  #allocation1 [shape = 'u32[144,128]{1,0:T(1,128)}', space=vmem, size = 0x12000, scoped, tag = 'internal scratch']
  #allocation2 [shape = 'f32[8,1]{1,0:T(8,128)}', space=vmem, size = 0x1000, scoped, tag = 'scratch operand']
  #allocation3 [shape = 'f32[8,4]{1,0:T(8,128)}', space=vmem, size = 0x1000, scoped, tag = 'scratch operand']
  %s0 = inlined_call_operand.vmem [shape: f32[8,16], index: 0, kind: input, shape index: {}]
  %s1 = inlined_call_operand.vmem [shape: s32[8,1], index: 1, kind: input, shape index: {}]
  %s2 = inlined_call_operand.vmem [shape: f32[8,4], index: 2, kind: input, shape index: {}]
  %s3 = inlined_call_operand.vmem [shape: f32[8,4], index: 3, kind: input, shape index: {}]
  %s4 = inlined_call_operand.hbm [shape: f32[1,2], index: 4, kind: output, shape index: {}]
  %s5 = sld [smem:[#allocation0]]
  $region34: #{tpu_custom_call.1} parent=0
    _
  %s7 = ssub.s32 1, %s5
  %s8 = scalar_select 0, %s7, %s5
  $region1: #{tpu_custom_call.1} parent=0
    #allocation4 [shape = 'u8[512]{0}', space=smem, size = 0x200, scoped, tag = 'output window, operand 0, single buffered']
    #allocation5 [shape = 's32[1]{0}', space=sflag, size = 0x4, scoped, tag = 'scoped memory for tpu_custom_call.1']
    %9 = vsyncpa [#allocation5], 0
    // Predicated region
    $region2: #{tpu_custom_call.1} parent=1 // pred_check
      _
    $region3: #{tpu_custom_call.1} parent=1 // pred_check_branch
      %11 = sbr.rel (0) target = $region5
    $region4: #{tpu_custom_call.1} parent=1 // pred_region
      %s12 = sadd.s32 0, 0
      %p13 = scmp.lt.s32.totalorder %s12, 0
      %s14 = scalar_select %p13, %s12, 0
      %s15 = smul.addr %s14, 8
      %s16 = scalar_lea.vmem %s0, %s15
      %s17 = sadd.s32 0, 0
    $region5: #{tpu_custom_call.1} parent=1 // pred_fallthru
      _
    // Predicated region
    $region6: #{tpu_custom_call.1} parent=1 // pred_check
      _
    $region7: #{tpu_custom_call.1} parent=1 // pred_check_branch
      %19 = sbr.rel (0) target = $region9
    $region8: #{tpu_custom_call.1} parent=1 // pred_region
      %s20 = sadd.s32 0, 0
      %p21 = scmp.lt.s32.totalorder %s20, 0
      %s22 = scalar_select %p21, %s20, 0
      %s23 = smul.addr %s22, 8
      %s24 = scalar_lea.vmem %s1, %s23
      %s25 = sadd.s32 0, 0
    $region9: #{tpu_custom_call.1} parent=1 // pred_fallthru
      _
    // Predicated region
    $region10: #{tpu_custom_call.1} parent=1 // pred_check
      _
    $region11: #{tpu_custom_call.1} parent=1 // pred_check_branch
      %27 = sbr.rel (0) target = $region13
    $region12: #{tpu_custom_call.1} parent=1 // pred_region
      %s28 = sadd.s32 0, 0
      %p29 = scmp.lt.s32.totalorder %s28, 0
      %s30 = scalar_select %p29, %s28, 0
      %s31 = smul.addr %s30, 8
      %s32 = scalar_lea.vmem %s2, %s31
      %s33 = sadd.s32 0, 0
    $region13: #{tpu_custom_call.1} parent=1 // pred_fallthru
      _
    // Predicated region
    $region14: #{tpu_custom_call.1} parent=1 // pred_check
      _
    $region15: #{tpu_custom_call.1} parent=1 // pred_check_branch
      %35 = sbr.rel (0) target = $region17
    $region16: #{tpu_custom_call.1} parent=1 // pred_region
      %s36 = sadd.s32 0, 0
      %p37 = scmp.lt.s32.totalorder %s36, 0
      %s38 = scalar_select %p37, %s36, 0
      %s39 = smul.addr %s38, 8
      %s40 = scalar_lea.vmem %s3, %s39
      %s41 = sadd.s32 0, 0
    $region17: #{tpu_custom_call.1} parent=1 // pred_fallthru
      _
    %s42 = sadd.s32 0, 0
    %p43 = scmp.lt.s32.totalorder %s42, 0
    %s44 = scalar_select %p43, %s42, 0
    %s45 = smul.addr %s44, 8
    %s46 = scalar_lea.vmem %s0, %s45
    %s47 = sadd.s32 0, 0
    %p48 = scmp.lt.s32.totalorder %s47, 0
    %s49 = scalar_select %p48, %s47, 0
    %s50 = smul.addr %s49, 8
    %s51 = scalar_lea.vmem %s1, %s50
    %s52 = sadd.s32 0, 0
    %p53 = scmp.lt.s32.totalorder %s52, 0
    %s54 = scalar_select %p53, %s52, 0
    %s55 = smul.addr %s54, 8
    %s56 = scalar_lea.vmem %s2, %s55
    %s57 = sadd.s32 0, 0
    %p58 = scmp.lt.s32.totalorder %s57, 0
    %s59 = scalar_select %p58, %s57, 0
    %s60 = smul.addr %s59, 8
    %s61 = scalar_lea.vmem %s3, %s60
    %s62 = sadd.s32 0, 0
    %p63 = scmp.lt.s32.totalorder %s62, 0
    %s64 = scalar_select %p63, %s62, 0
    %s65 = smul.addr %s64, 8
    %s66 = scalar_lea.vmem %s0, %s65
    %s67 = sadd.s32 0, 0
    %s68 = sadd.s32 0, 0
    %p69 = scmp.lt.s32.totalorder %s68, 0
    %s70 = scalar_select %p69, %s68, 0
    %s71 = smul.addr %s70, 8
    %s72 = scalar_lea.vmem %s1, %s71
    %s73 = sadd.s32 0, 0
    %s74 = sadd.s32 0, 0
    %p75 = scmp.lt.s32.totalorder %s74, 0
    %s76 = scalar_select %p75, %s74, 0
    %s77 = smul.addr %s76, 8
    %s78 = scalar_lea.vmem %s2, %s77
    %s79 = sadd.s32 0, 0
    %s80 = sadd.s32 0, 0
    %p81 = scmp.lt.s32.totalorder %s80, 0
    %s82 = scalar_select %p81, %s80, 0
    %s83 = smul.addr %s82, 8
    %s84 = scalar_lea.vmem %s3, %s83
    %s85 = sadd.s32 0, 0
    %p86 = scmp.eq.s32.totalorder 0, 0
    // Predicated region
    $region18: #{tpu_custom_call.1} parent=1 // pred_check
      %p87 = pneg %p86
    $region19: #{tpu_custom_call.1} parent=1 // pred_check_branch
      %89 = sbr.rel (%p87) target = $region21
    $region20: #{tpu_custom_call.1} parent=1 // pred_region
      %vm90 = vcmask 7168
      %91 = vst.msk [vmem:[#allocation2] sm:$0xff] %vm90, 0.0
      %vm92 = vcmask 31744
      %93 = vst.msk [vmem:[#allocation3] sm:$0xff] %vm92, 0.0
    $region21: #{tpu_custom_call.1} parent=1 // pred_fallthru
      _
    %v94 = vld [vmem:[%s66] sm:$0xff]
    %v95 = vld [vmem:[%s72] sm:$0xff]
    %vm96 = vcmask 130048
    %v97 = vsel %vm96, %v94, -inf
    %98 = vmax.xlane.f32.xlu0 %v97
    %v99 = vpop.xlane.xlu0 %98
    %v100 = vsub.f32 %v94, %v99
    %v101 = vmul.f32 %v100, 1.442695
    %v102 = vpow.pop %v101
    %v103 = vsel %vm96, %v102, 0.0
    %104 = vadd.xlane.f32.xlu0 %v103
    %v105 = vpop.xlane.xlu0 %104
    %v106 = vlog2.pop %v105
    %v107 = vmul.f32 %v106, 0.6931472
    %v108 = vlaneseq
    %v109 = vand.u32 %v108, 127
    %110 = vset.pattern.permute.xlu0 0
    %111 = vperm.xlu0 %110, %v95
    %v112 = vpop.permute.xlu0 %111
    %vm113 = vcmp.eq.s32.totalorder %v109, %v112
    %v114 = vsel %vm113, %v100, 0.0
    %v115 = vsel %vm96, %v114, 0.0
    %116 = vadd.xlane.f32.xlu0 %v115
    %v117 = vpop.xlane.xlu0 %116
    %v118 = vsub.f32 %v107, %v117
    %v119 = vld [vmem:[%s78] sm:$0xff]
    %v120 = vld [vmem:[%s84] sm:$0xff]
    %v121 = vsub.f32 %v119, %v120
    %v122 = vand.u32 2147483647, %v121
    %vm123 = vcmp.lt.f32.partialorder %v122, 1.0
    %v124 = vmul.f32 %v121, 0.5
    %v125 = vmul.f32 %v124, %v121
    %v126 = vsub.f32 %v122, 0.5
    %v127 = vsel %vm123, %v125, %v126
    %v128 = vld [vmem:[#allocation2] sm:$0xff]
    %v129 = vadd.f32 %v128, %v118
    %vm130 = vcmask 7168
    %131 = vst.msk [vmem:[#allocation2] sm:$0xff] %vm130, %v129
    %v132 = vld [vmem:[#allocation3] sm:$0xff]
    %v133 = vadd.f32 %v132, %v127
    %vm134 = vcmask 31744
    %135 = vst.msk [vmem:[#allocation3] sm:$0xff] %vm134, %v133
    // Predicated region
    $region22: #{tpu_custom_call.1} parent=1 // pred_check
      %p136 = pneg %p86
    $region23: #{tpu_custom_call.1} parent=1 // pred_check_branch
      %138 = sbr.rel (%p136) target = $region25
    $region24: #{tpu_custom_call.1} parent=1 // pred_region
      %v139 = vld [vmem:[#allocation2] sm:$0xff]
      %v140 = vsel %vm130, %v139, 0.0
      %141 = vadd.xlane.f32.xlu0 %v140
      %v142 = vpop.xlane.xlu0 %141
      %v143 = vrot.slane %v142, 4
      %v144 = vadd.f32 %v142, %v143
      %v145 = vrot.slane %v144, 2
      %v146 = vadd.f32 %v144, %v145
      %v147 = vrot.slane %v146, 1
      %v148 = vadd.f32 %v146, %v147
      %s149 = vtos %v148
      %s150 = smul.f32 %s149, 0.125
      %s151 = scalar_lea.smem [#allocation4], 0
      %152 = sst [smem:[%s151]] %s150
      %v153 = vld [vmem:[#allocation3] sm:$0xff]
      %v154 = vsel %vm134, %v153, 0.0
      %155 = vadd.xlane.f32.xlu0 %v154
      %v156 = vpop.xlane.xlu0 %155
      %v157 = vrot.slane %v156, 4
      %v158 = vadd.f32 %v156, %v157
      %v159 = vrot.slane %v158, 2
      %v160 = vadd.f32 %v158, %v159
      %v161 = vrot.slane %v160, 1
      %v162 = vadd.f32 %v160, %v161
      %s163 = vtos %v162
      %s164 = smul.f32 %s163, 0.03125
      %s165 = scalar_lea.smem [#allocation4], 1
      %166 = sst [smem:[%s165]] %s164
    $region25: #{tpu_custom_call.1} parent=1 // pred_fallthru
      _
    // Predicated region
    $region26: #{tpu_custom_call.1} parent=1 // pred_check
      _
    $region27: #{tpu_custom_call.1} parent=1 // pred_check_branch
      %168 = sbr.rel (0) target = $region29
    $region28: #{tpu_custom_call.1} parent=1 // pred_region
      %s170 = ssub.s32 16, 16
      %171 = vsyncadd [#allocation5], %s170
      %174 = dma.smem_to_hbm [#allocation4], 16, %s4, [#allocation5]
    $region29: #{tpu_custom_call.1} parent=1 // pred_fallthru
      _
    // Predicated region
    $region30: #{tpu_custom_call.1} parent=1 // pred_check
      _
    $region31: #{tpu_custom_call.1} parent=1 // pred_check_branch
      %176 = sbr.rel (0) target = $region33
    $region32: #{tpu_custom_call.1} parent=1 // pred_region
      %177 = dma.done [#allocation5], 16
    $region33: #{tpu_custom_call.1} parent=1 // pred_fallthru
      _
    %178 = sfence
    %179 = vsyncpa [#allocation5], 1

</llo_original>
